<compile_context>
chip_gen: v7x
topology: tpu7x:2x2x1
jax: 0.10.0
libtpu: 0.0.40
codegen_flags: <defaults>
</compile_context>

<pallas_src>
import functools

import jax
import jax.numpy as jnp
import numpy as np
from jax.experimental import pallas as pl
from jax.experimental.pallas import tpu as pltpu


def _round_up(x, m):
    return ((x + m - 1) // m) * m


def _cdiv(a, b):
    return -(-a // b)


# Conservative double-buffered footprint budget: fits v5e's 16 MiB default
# scoped VMEM with headroom (and trivially v6e/v7x).
_VMEM_BUDGET = 12 * 1024 * 1024
_MAX_TILE_B = 65536   # lanes per CE tile; shrunk only by the byte budget
_MAX_TILE_R = 4096    # rows (of 128 lanes) per accuracy tile
_NUM_SPLITS = 2       # leading "parallel" grid axis (both TCs on v7x)


# ---------------------------------------------------------------------------
# In-kernel math helpers (operate on the (class, batch-on-lanes) layout)
# ---------------------------------------------------------------------------
def _masked_ce_sum(logits_f32, labels_i32):
    """logits: (N, T) f32, labels: (1, T) i32 -> (1, 1) f32 masked CE sum."""
    m = jnp.max(logits_f32, axis=0, keepdims=True)                      # (1, T)
    lse = m + jnp.log(jnp.sum(jnp.exp(logits_f32 - m), axis=0, keepdims=True))
    cls = jax.lax.broadcasted_iota(jnp.int32, logits_f32.shape, 0)      # (N, T)
    picked = jnp.sum(jnp.where(cls == labels_i32, logits_f32, 0.0),
                     axis=0, keepdims=True)                             # (1, T)
    ce = jnp.where(labels_i32 >= 0, lse - picked, 0.0)                  # (1, T)
    return jnp.sum(ce, axis=1, keepdims=True)                           # (1, 1)


def _masked_hit_sum(preds_i32, labels_i32):
    """preds/labels: (R, C) i32 -> (1, 1) f32 masked hit count."""
    h = jnp.where(jnp.logical_and(labels_i32 >= 0, preds_i32 == labels_i32),
                  1.0, 0.0)
    return jnp.sum(jnp.sum(h, axis=1, keepdims=True), axis=0, keepdims=True)


# ---------------------------------------------------------------------------
# Kernel bodies (grid = (splits [parallel], tiles_per_split [arbitrary]))
# ---------------------------------------------------------------------------
def _ce_kernel(logits_ref, labels_ref, out_ref, acc_ref):
    k = pl.program_id(1)

    @pl.when(k == 0)
    def _init():
        acc_ref[...] = jnp.zeros_like(acc_ref)

    logits = logits_ref[...].astype(jnp.float32)      # upcast on the vregs
    acc_ref[...] += _masked_ce_sum(logits, labels_ref[...])

    @pl.when(k == pl.num_programs(1) - 1)
    def _fin():
        out_ref[...] = jnp.broadcast_to(acc_ref[...], out_ref.shape)


def _acc_kernel(pred_ref, label_ref, out_ref, acc_ref):
    k = pl.program_id(1)

    @pl.when(k == 0)
    def _init():
        acc_ref[...] = jnp.zeros_like(acc_ref)

    acc_ref[...] += _masked_hit_sum(pred_ref[...], label_ref[...])

    @pl.when(k == pl.num_programs(1) - 1)
    def _fin():
        out_ref[...] = jnp.broadcast_to(acc_ref[...], out_ref.shape)


def _fused_kernel(logits_ref, labels_ref, preds_ref, loss_out_ref, acc_out_ref,
                  loss_acc, hit_acc):
    k = pl.program_id(1)

    @pl.when(k == 0)
    def _init():
        loss_acc[...] = jnp.zeros_like(loss_acc)
        hit_acc[...] = jnp.zeros_like(hit_acc)

    logits = logits_ref[...].astype(jnp.float32)
    labels = labels_ref[...]
    loss_acc[...] += _masked_ce_sum(logits, labels)
    hit_acc[...] += _masked_hit_sum(preds_ref[...], labels)

    @pl.when(k == pl.num_programs(1) - 1)
    def _fin():
        loss_out_ref[...] = jnp.broadcast_to(loss_acc[...], loss_out_ref.shape)
        acc_out_ref[...] = jnp.broadcast_to(hit_acc[...], acc_out_ref.shape)


# ---------------------------------------------------------------------------
# Tiling plans (byte budget counts every double-buffered, sublane-padded tile)
# ---------------------------------------------------------------------------
def _ce_plan(n_cls, b, itemsize, n_i32_rows, max_tile_b):
    cap = _MAX_TILE_B if max_tile_b is None else max_tile_b
    cap = max(128, _round_up(cap, 128))
    tile_b = min(cap, _round_up(max(b, 1), 128))

    def footprint(t):
        logits_eff = _round_up(n_cls, 8) * itemsize * t          # logits tile
        i32_eff = n_i32_rows * 8 * 4 * t                         # (1,t) rows pad to 8 sublanes
        return 2 * (logits_eff + i32_eff)                        # double-buffered

    while tile_b > 128 and footprint(tile_b) > _VMEM_BUDGET:
        tile_b = max(128, _round_up(tile_b // 2, 128))

    num_tiles = _cdiv(max(b, 1), tile_b)
    splits = _NUM_SPLITS if num_tiles >= _NUM_SPLITS else 1
    tps = _cdiv(num_tiles, splits)
    b_pad = splits * tps * tile_b
    return tile_b, splits, tps, b_pad


def _eq_plan(n, max_tile_r):
    cap = _MAX_TILE_R if max_tile_r is None else max_tile_r
    cap = max(8, _round_up(cap, 8))
    rows = max(8, _round_up(_cdiv(max(n, 1), 128), 8))
    tile_r = min(cap, rows)

    def footprint(t):
        return 2 * 2 * t * 128 * 4                               # pred + label, x2 buffers

    while tile_r > 8 and footprint(tile_r) > _VMEM_BUDGET:
        tile_r = max(8, _round_up(tile_r // 2, 8))

    num_tiles = _cdiv(rows, tile_r)
    splits = _NUM_SPLITS if num_tiles >= _NUM_SPLITS else 1
    tps = _cdiv(num_tiles, splits)
    rows_pad = splits * tps * tile_r
    return tile_r, splits, tps, rows_pad


# ---------------------------------------------------------------------------
# Cached builders: one pallas_call + jitted wrapper per configuration
# ---------------------------------------------------------------------------
@functools.lru_cache(maxsize=None)
def _build_loss_fn(n_cls, b, logits_dtype_name, max_tile_b):
    itemsize = jnp.dtype(logits_dtype_name).itemsize
    tile_b, splits, tps, b_pad = _ce_plan(n_cls, b, itemsize, 1, max_tile_b)

    call = pl.pallas_call(
        _ce_kernel,
        out_shape=jax.ShapeDtypeStruct((splits, 8, 128), jnp.float32),
        grid=(splits, tps),
        in_specs=[
            pl.BlockSpec((n_cls, tile_b), lambda p, k: (0, p * tps + k)),
            pl.BlockSpec((1, tile_b), lambda p, k: (0, p * tps + k)),
        ],
        out_specs=pl.BlockSpec((1, 8, 128), lambda p, k: (p, 0, 0)),
        scratch_shapes=[pltpu.VMEM((1, 1), jnp.float32)],
        compiler_params=pltpu.CompilerParams(
            dimension_semantics=("parallel", "arbitrary")),
    )

    def fn(logits, label):
        # (class, batch-on-lanes) layout + padding; fused under jit into one
        # HBM relayout pass feeding the kernel.
        logits_t = jnp.pad(logits.reshape(-1, n_cls).T,
                           ((0, 0), (0, b_pad - b)))
        labels_row = jnp.pad(label.reshape(1, -1).astype(jnp.int32),
                             ((0, 0), (0, b_pad - b)), constant_values=-1)
        partial = call(logits_t, labels_row)                 # (splits, 8, 128)
        return jnp.sum(partial[:, 0, 0]) * (1.0 / b)

    return jax.jit(fn)


@functools.lru_cache(maxsize=None)
def _build_accuracy_fn(n, max_tile_r):
    tile_r, splits, tps, rows_pad = _eq_plan(n, max_tile_r)
    total = rows_pad * 128

    call = pl.pallas_call(
        _acc_kernel,
        out_shape=jax.ShapeDtypeStruct((splits, 8, 128), jnp.float32),
        grid=(splits, tps),
        in_specs=[
            pl.BlockSpec((tile_r, 128), lambda p, k: (p * tps + k, 0)),
            pl.BlockSpec((tile_r, 128), lambda p, k: (p * tps + k, 0)),
        ],
        out_specs=pl.BlockSpec((1, 8, 128), lambda p, k: (p, 0, 0)),
        scratch_shapes=[pltpu.VMEM((1, 1), jnp.float32)],
        compiler_params=pltpu.CompilerParams(
            dimension_semantics=("parallel", "arbitrary")),
    )

    def fn(pred, label):
        p = jnp.pad(pred.reshape(-1).astype(jnp.int32),
                    (0, total - n)).reshape(rows_pad, 128)
        l = jnp.pad(label.reshape(-1).astype(jnp.int32),
                    (0, total - n), constant_values=-1).reshape(rows_pad, 128)
        partial = call(p, l)                                  # (splits, 8, 128)
        return jnp.sum(partial[:, 0, 0]) * (1.0 / n)

    return jax.jit(fn)


@functools.lru_cache(maxsize=None)
def _build_fused_fn(n_cls, b, logits_dtype_name, max_tile_b):
    itemsize = jnp.dtype(logits_dtype_name).itemsize
    tile_b, splits, tps, b_pad = _ce_plan(n_cls, b, itemsize, 2, max_tile_b)

    call = pl.pallas_call(
        _fused_kernel,
        out_shape=(jax.ShapeDtypeStruct((splits, 8, 128), jnp.float32),
                   jax.ShapeDtypeStruct((splits, 8, 128), jnp.float32)),
        grid=(splits, tps),
        in_specs=[
            pl.BlockSpec((n_cls, tile_b), lambda p, k: (0, p * tps + k)),
            pl.BlockSpec((1, tile_b), lambda p, k: (0, p * tps + k)),
            pl.BlockSpec((1, tile_b), lambda p, k: (0, p * tps + k)),
        ],
        out_specs=(pl.BlockSpec((1, 8, 128), lambda p, k: (p, 0, 0)),
                   pl.BlockSpec((1, 8, 128), lambda p, k: (p, 0, 0))),
        scratch_shapes=[pltpu.VMEM((1, 1), jnp.float32),
                        pltpu.VMEM((1, 1), jnp.float32)],
        compiler_params=pltpu.CompilerParams(
            dimension_semantics=("parallel", "arbitrary")),
    )

    def fn(logits, pred, label):
        logits_t = jnp.pad(logits.reshape(-1, n_cls).T,
                           ((0, 0), (0, b_pad - b)))
        labels_row = jnp.pad(label.reshape(1, -1).astype(jnp.int32),
                             ((0, 0), (0, b_pad - b)), constant_values=-1)
        preds_row = jnp.pad(pred.reshape(1, -1).astype(jnp.int32),
                            ((0, 0), (0, b_pad - b)))
        loss_p, acc_p = call(logits_t, labels_row, preds_row)
        inv_b = 1.0 / b
        return (jnp.sum(loss_p[:, 0, 0]) * inv_b,
                jnp.sum(acc_p[:, 0, 0]) * inv_b)

    return jax.jit(fn)


# ---------------------------------------------------------------------------
# Public wrappers (mirror FewShotREModel.loss / .accuracy, plus a fused path)
# ---------------------------------------------------------------------------
def cross_entropy_loss(logits, label, max_tile_b=None):
    """logits: (..., N) float; label: (...,) int. Returns scalar f32 mean CE."""
    n_cls = int(logits.shape[-1])
    b = int(logits.size) // n_cls
    fn = _build_loss_fn(n_cls, b, jnp.dtype(logits.dtype).name, max_tile_b)
    return fn(logits, label)


def accuracy(pred, label, max_tile_r=None):
    """pred/label: any shape int. Returns scalar f32 mean(pred == label)."""
    n = max(1, int(label.size))
    fn = _build_accuracy_fn(n, max_tile_r)
    return fn(pred, label)


def loss_and_accuracy(logits, pred, label, max_tile_b=None):
    """Fused single-launch path: returns (mean CE loss, mean accuracy)."""
    n_cls = int(logits.shape[-1])
    b = int(logits.size) // n_cls
    fn = _build_fused_fn(n_cls, b, jnp.dtype(logits.dtype).name, max_tile_b)
    return fn(logits, pred, label)


# ---------------------------------------------------------------------------
# Plain-JAX references for verification
# ---------------------------------------------------------------------------
def _ce_loss_ref(logits, labels):
    logits2d = logits.reshape(-1, logits.shape[-1]).astype(jnp.float32)
    labels1d = labels.reshape(-1).astype(jnp.int32)
    logz = jax.scipy.special.logsumexp(logits2d, axis=-1)
    picked = jnp.take_along_axis(logits2d, labels1d[:, None], axis=-1)[:, 0]
    return jnp.mean(logz - picked)


def _accuracy_ref(pred, label):
    return jnp.mean((pred.reshape(-1) == label.reshape(-1)).astype(jnp.float32))


if __name__ == "__main__":
    key = jax.random.PRNGKey(0)
    k1, k2, k3, k4, k5, k6, k7, k8, k9 = jax.random.split(key, 9)

    # --- Case 1: canonical few-shot shapes (2 episodes, N=8 classes, Q=5). ---
    EPISODES, N_CLS, Q = 2, 8, 5
    logits = jax.random.normal(k1, (EPISODES, N_CLS * Q, N_CLS), jnp.float32)
    labels = jax.random.randint(k2, (EPISODES, N_CLS * Q), 0, N_CLS, jnp.int32)
    preds = jax.random.randint(k3, (EPISODES, N_CLS * Q), 0, N_CLS, jnp.int32)

    loss_val = jax.block_until_ready(cross_entropy_loss(logits, labels))
    acc_val = jax.block_until_ready(accuracy(preds, labels))
    loss_f, acc_f = jax.block_until_ready(loss_and_accuracy(logits, preds, labels))

    np.testing.assert_allclose(np.asarray(loss_val),
                               np.asarray(_ce_loss_ref(logits, labels)),
                               rtol=1e-5, atol=1e-5)
    np.testing.assert_allclose(np.asarray(acc_val),
                               np.asarray(_accuracy_ref(preds, labels)),
                               rtol=1e-6, atol=1e-6)
    np.testing.assert_allclose(np.asarray(loss_f),
                               np.asarray(_ce_loss_ref(logits, labels)),
                               rtol=1e-5, atol=1e-5)
    np.testing.assert_allclose(np.asarray(acc_f),
                               np.asarray(_accuracy_ref(preds, labels)),
                               rtol=1e-6, atol=1e-6)

    # --- Case 2: multi-tile + 2-way parallel-split path (forced small tiles). -
    B2, N2 = 1000, 10
    logits2 = jax.random.normal(k4, (B2, N2), jnp.float32)
    labels2 = jax.random.randint(k5, (B2,), 0, N2, jnp.int32)
    preds2 = jax.random.randint(k6, (B2,), 0, N2, jnp.int32)

    loss2 = jax.block_until_ready(cross_entropy_loss(logits2, labels2,
                                                     max_tile_b=256))
    loss2f, acc2f = jax.block_until_ready(
        loss_and_accuracy(logits2, preds2, labels2, max_tile_b=256))
    np.testing.assert_allclose(np.asarray(loss2),
                               np.asarray(_ce_loss_ref(logits2, labels2)),
                               rtol=1e-5, atol=1e-5)
    np.testing.assert_allclose(np.asarray(loss2f),
                               np.asarray(_ce_loss_ref(logits2, labels2)),
                               rtol=1e-5, atol=1e-5)
    np.testing.assert_allclose(np.asarray(acc2f),
                               np.asarray(_accuracy_ref(preds2, labels2)),
                               rtol=1e-6, atol=1e-6)

    # Accuracy path with multi-tile + split (forced tiny row tile).
    B3 = 2500
    labels3 = jax.random.randint(k7, (B3,), 0, N2, jnp.int32)
    preds3 = jax.random.randint(k8, (B3,), 0, N2, jnp.int32)
    acc3 = jax.block_until_ready(accuracy(preds3, labels3, max_tile_r=8))
    np.testing.assert_allclose(np.asarray(acc3),
                               np.asarray(_accuracy_ref(preds3, labels3)),
                               rtol=1e-6, atol=1e-6)

    # --- Case 3: bf16 logits (in-kernel upcast path). ---
    logits_bf = jax.random.normal(k9, (EPISODES, N_CLS * Q, N_CLS),
                                  jnp.bfloat16)
    loss_bf = jax.block_until_ready(cross_entropy_loss(logits_bf, labels))
    np.testing.assert_allclose(np.asarray(loss_bf),
                               np.asarray(_ce_loss_ref(logits_bf, labels)),
                               rtol=1e-4, atol=1e-4)

    print("KERNEL_OK")
</pallas_src>

<mosaic_0001>
module attributes {stable_mosaic.version = 11 : i64} {
  func.func @_ce_kernel(%arg0: i32, %arg1: i32, %arg2: memref<8x128xf32, #tpu.memory_space<vmem>>, %arg3: memref<1x128xi32, #tpu.memory_space<vmem>>, %arg4: memref<1x8x128xf32, #tpu.memory_space<vmem>>, %arg5: memref<1x1xf32, #tpu.memory_space<vmem>>) attributes {dimension_semantics = [#tpu.dimension_semantics<parallel>, #tpu.dimension_semantics<arbitrary>], iteration_bounds = array<i64: 1, 1>, scalar_prefetch = 0 : i64, scratch_operands = 1 : i64, tpu.core_type = #tpu.core_type<tc>, window_params = [{transform_indices = @transform_0, window_bounds = array<i64: 8, 128>}, {transform_indices = @transform_1, window_bounds = array<i64: 1, 128>}, {transform_indices = @transform_2, window_bounds = array<i64: 1, 8, 128>}]} {
    %c0_i32 = arith.constant 0 : i32
    %0 = arith.cmpi eq, %arg1, %c0_i32 : i32
    %1 = arith.extui %0 : i1 to i32
    %c0_i32_0 = arith.constant 0 : i32
    %2 = arith.cmpi ne, %1, %c0_i32_0 : i32
    scf.if %2 {
      %cst_16 = arith.constant 0.000000e+00 : f32
      %34 = vector.broadcast %cst_16 : f32 to vector<1x1xf32>
      %c0_17 = arith.constant 0 : index
      %c0_18 = arith.constant 0 : index
      %35 = vector.load %arg5[%c0_17, %c0_18] : memref<1x1xf32, #tpu.memory_space<vmem>>, vector<1x1xf32>
      tpu.vector_store %arg5[%c0_17, %c0_18], %34 {strides = array<i32>} : memref<1x1xf32, #tpu.memory_space<vmem>>, vector<1x1xf32>,
    } else {
    }
    %c0 = arith.constant 0 : index
    %c0_1 = arith.constant 0 : index
    %3 = vector.load %arg2[%c0, %c0_1] : memref<8x128xf32, #tpu.memory_space<vmem>>, vector<8x128xf32>
    %c0_2 = arith.constant 0 : index
    %c0_3 = arith.constant 0 : index
    %4 = vector.load %arg5[%c0_2, %c0_3] : memref<1x1xf32, #tpu.memory_space<vmem>>, vector<1x1xf32>
    %c0_4 = arith.constant 0 : index
    %c0_5 = arith.constant 0 : index
    %5 = vector.load %arg3[%c0_4, %c0_5] : memref<1x128xi32, #tpu.memory_space<vmem>>, vector<1x128xi32>
    %cst = arith.constant dense<0xFF800000> : vector<128xf32>
    %6 = vector.multi_reduction <maximumf>, %3, %cst [0] : vector<8x128xf32> to vector<128xf32>
    %7 = vector.shape_cast %6 : vector<128xf32> to vector<1x128xf32>
    %8 = vector.broadcast %7 : vector<1x128xf32> to vector<8x128xf32>
    %9 = arith.subf %3, %8 : vector<8x128xf32>
    %10 = math.exp %9 : vector<8x128xf32>
    %cst_6 = arith.constant dense<0.000000e+00> : vector<128xf32>
    %11 = vector.multi_reduction <add>, %10, %cst_6 [0] : vector<8x128xf32> to vector<128xf32>
    %12 = vector.shape_cast %11 : vector<128xf32> to vector<1x128xf32>
    %13 = math.log %12 : vector<1x128xf32>
    %14 = arith.addf %7, %13 : vector<1x128xf32>
    %15 = tpu.iota {dimensions = array<i32: 0>} : vector<8x128xi32>
    %16 = vector.broadcast %5 : vector<1x128xi32> to vector<8x128xi32>
    %17 = arith.cmpi eq, %15, %16 : vector<8x128xi32>
    %cst_7 = arith.constant 0.000000e+00 : f32
    %18 = vector.broadcast %cst_7 : f32 to vector<8x128xf32>
    %19 = arith.select %17, %3, %18 : vector<8x128xi1>, vector<8x128xf32>
    %cst_8 = arith.constant dense<0.000000e+00> : vector<128xf32>
    %20 = vector.multi_reduction <add>, %19, %cst_8 [0] : vector<8x128xf32> to vector<128xf32>
    %21 = vector.shape_cast %20 : vector<128xf32> to vector<1x128xf32>
    %c0_i32_9 = arith.constant 0 : i32
    %22 = vector.broadcast %c0_i32_9 : i32 to vector<1x128xi32>
    %23 = arith.cmpi sge, %5, %22 : vector<1x128xi32>
    %24 = arith.subf %14, %21 : vector<1x128xf32>
    %cst_10 = arith.constant 0.000000e+00 : f32
    %25 = vector.broadcast %cst_10 : f32 to vector<1x128xf32>
    %26 = arith.select %23, %24, %25 : vector<1x128xi1>, vector<1x128xf32>
    %cst_11 = arith.constant dense<0.000000e+00> : vector<1xf32>
    %27 = vector.multi_reduction <add>, %26, %cst_11 [1] : vector<1x128xf32> to vector<1xf32>
    %28 = vector.shape_cast %27 : vector<1xf32> to vector<1x1xf32>
    %29 = arith.addf %4, %28 : vector<1x1xf32>
    %c0_12 = arith.constant 0 : index
    %c0_13 = arith.constant 0 : index
    %30 = vector.load %arg5[%c0_12, %c0_13] : memref<1x1xf32, #tpu.memory_space<vmem>>, vector<1x1xf32>
    tpu.vector_store %arg5[%c0_12, %c0_13], %29 {strides = array<i32>} : memref<1x1xf32, #tpu.memory_space<vmem>>, vector<1x1xf32>,
    %c0_i32_14 = arith.constant 0 : i32
    %31 = arith.cmpi eq, %arg1, %c0_i32_14 : i32
    %32 = arith.extui %31 : i1 to i32
    %c0_i32_15 = arith.constant 0 : i32
    %33 = arith.cmpi ne, %32, %c0_i32_15 : i32
    scf.if %33 {
      %c0_16 = arith.constant 0 : index
      %c0_17 = arith.constant 0 : index
      %34 = vector.load %arg5[%c0_16, %c0_17] : memref<1x1xf32, #tpu.memory_space<vmem>>, vector<1x1xf32>
      %35 = vector.shape_cast %34 : vector<1x1xf32> to vector<1x1x1xf32>
      %36 = vector.broadcast %35 : vector<1x1x1xf32> to vector<1x8x128xf32>
      %c0_18 = arith.constant 0 : index
      %c0_19 = arith.constant 0 : index
      %c0_20 = arith.constant 0 : index
      %37 = vector.load %arg4[%c0_18, %c0_19, %c0_20] : memref<1x8x128xf32, #tpu.memory_space<vmem>>, vector<1x8x128xf32>
      tpu.vector_store %arg4[%c0_18, %c0_19, %c0_20], %36 {strides = array<i32>} : memref<1x8x128xf32, #tpu.memory_space<vmem>>, vector<1x8x128xf32>,
    } else {
    }
    return
  }
  func.func @transform_0(%arg0: i32, %arg1: i32) -> (i32, i32) {
    %c1_i32 = arith.constant 1 : i32
    %0 = arith.muli %arg0, %c1_i32 : i32
    %1 = arith.addi %0, %arg1 : i32
    %c0_i32 = arith.constant 0 : i32
    %c0_i32_0 = arith.constant 0 : i32
    return %c0_i32, %1 : i32, i32
  }
  func.func @transform_1(%arg0: i32, %arg1: i32) -> (i32, i32) {
    %c1_i32 = arith.constant 1 : i32
    %0 = arith.muli %arg0, %c1_i32 : i32
    %1 = arith.addi %0, %arg1 : i32
    %c0_i32 = arith.constant 0 : i32
    %c0_i32_0 = arith.constant 0 : i32
    return %c0_i32, %1 : i32, i32
  }
  func.func @transform_2(%arg0: i32, %arg1: i32) -> (i32, i32, i32) {
    %c0_i32 = arith.constant 0 : i32
    %c0_i32_0 = arith.constant 0 : i32
    %c0_i32_1 = arith.constant 0 : i32
    return %arg0, %c0_i32, %c0_i32_0 : i32, i32, i32
  }
}

</mosaic_0001>

<llo_original>
// kernel: fn.1
$region0: #{fn.1}
  #allocation0 [shape = 'u32[]', space=smem, size = 0x4, offset = 0x4, fixed_abs, tag = 'smem constant byte address 0x4 - core index']
  #allocation1 [shape = 'u32[144,128]{1,0:T(1,128)}', space=vmem, size = 0x12000, scoped, tag = 'internal scratch']
  #allocation2 [shape = 'f32[1,1]{1,0:T(1,128)}', space=vmem, size = 0x200, scoped, tag = 'scratch operand']
  %s0 = inlined_call_operand.vmem [shape: f32[8,128], index: 0, kind: input, shape index: {}]
  %s1 = inlined_call_operand.vmem [shape: s32[1,128], index: 1, kind: input, shape index: {}]
  %s2 = inlined_call_operand.vmem [shape: f32[1,8,128], index: 2, kind: output, shape index: {}]
  %s3 = sld [smem:[#allocation0]]
  $region26: #{fn.1} parent=0
    _
  %s5 = ssub.s32 1, %s3
  %s6 = scalar_select 0, %s5, %s3
  // Predicated region
  $region2: #{fn.1} parent=0 // pred_check
    _
  $region3: #{fn.1} parent=0 // pred_check_branch
    %8 = sbr.rel (0) target = $region5
  $region4: #{fn.1} parent=0 // pred_region
    %s9 = sadd.s32 0, 0
    %p10 = scmp.lt.s32.totalorder %s9, 0
    %s11 = scalar_select %p10, %s9, 0
    %s12 = smul.addr %s11, 8
    %s13 = scalar_lea.vmem %s0, %s12
    %s14 = sadd.s32 0, 0
  $region5: #{fn.1} parent=0 // pred_fallthru
    _
  // Predicated region
  $region6: #{fn.1} parent=0 // pred_check
    _
  $region7: #{fn.1} parent=0 // pred_check_branch
    %16 = sbr.rel (0) target = $region9
  $region8: #{fn.1} parent=0 // pred_region
    %s17 = sadd.s32 0, 0
    %p18 = scmp.lt.s32.totalorder %s17, 0
    %s19 = scalar_select %p18, %s17, 0
    %s20 = scalar_lea.vmem %s1, %s19
    %s21 = sadd.s32 0, 0
  $region9: #{fn.1} parent=0 // pred_fallthru
    _
  %s22 = sadd.s32 0, 0
  %p23 = scmp.lt.s32.totalorder %s22, 0
  %s24 = scalar_select %p23, %s22, 0
  %s25 = smul.addr %s24, 8
  %s26 = scalar_lea.vmem %s0, %s25
  %s27 = sadd.s32 0, 0
  %p28 = scmp.lt.s32.totalorder %s27, 0
  %s29 = scalar_select %p28, %s27, 0
  %s30 = scalar_lea.vmem %s1, %s29
  %s31 = sadd.s32 0, 0
  %p32 = scmp.lt.s32.totalorder %s31, 0
  %s33 = scalar_select %p32, %s31, 0
  %s34 = smul.addr %s33, 8
  %s35 = scalar_lea.vmem %s0, %s34
  %s36 = sadd.s32 0, 0
  %s37 = sadd.s32 0, 0
  %p38 = scmp.lt.s32.totalorder %s37, 0
  %s39 = scalar_select %p38, %s37, 0
  %s40 = scalar_lea.vmem %s1, %s39
  %s41 = sadd.s32 0, 0
  %p42 = scmp.eq.s32.totalorder 0, 0
  // Predicated region
  $region10: #{fn.1} parent=0 // pred_check
    %p43 = pneg %p42
  $region11: #{fn.1} parent=0 // pred_check_branch
    %45 = sbr.rel (%p43) target = $region13
  $region12: #{fn.1} parent=0 // pred_region
    %vm46 = vcmask 0
    %47 = vst.msk [vmem:[#allocation2] sm:$0x1] %vm46, 0.0
  $region13: #{fn.1} parent=0 // pred_fallthru
    _
  %v48 = vld [vmem:[%s35] sm:$0xff]
  %v49 = vld [vmem:[#allocation2] sm:$0x1]
  %v50 = vld [vmem:[%s40] sm:$0x1]
  %v51 = vrot.slane %v48, 4
  %v52 = vmax.f32 %v48, %v51
  %v53 = vrot.slane %v52, 2
  %v54 = vmax.f32 %v52, %v53
  %v55 = vrot.slane %v54, 1
  %v56 = vmax.f32 %v54, %v55
  %v57 = vsub.f32 %v48, %v56
  %v58 = vmul.f32 %v57, 1.442695
  %v59 = vpow.pop %v58
  %v60 = vrot.slane %v59, 4
  %v61 = vadd.f32 %v59, %v60
  %v62 = vrot.slane %v61, 2
  %v63 = vadd.f32 %v61, %v62
  %v64 = vrot.slane %v63, 1
  %v65 = vadd.f32 %v63, %v64
  %v66 = vlog2.pop %v65
  %v67 = vmul.f32 %v66, 0.6931472
  %v68 = vadd.f32 %v56, %v67
  %v69 = vlaneseq
  %v70 = vshrl.u32 %v69, 7
  %v71 = vlaneseq
  %v72 = vshrl.u32 %v71, 7
  %v73 = vsub.s32 0, %v72
  %v74 = vrot.slane %v50, %v73
  %vm75 = vcmp.eq.s32.totalorder %v70, %v74
  %v76 = vsel %vm75, %v48, 0.0
  %v77 = vrot.slane %v76, 4
  %v78 = vadd.f32 %v76, %v77
  %v79 = vrot.slane %v78, 2
  %v80 = vadd.f32 %v78, %v79
  %v81 = vrot.slane %v80, 1
  %v82 = vadd.f32 %v80, %v81
  %vm83 = vcmp.ge.s32.totalorder %v50, 0
  %v84 = vsub.f32 %v68, %v82
  %v85 = vsel %vm83, %v84, 0.0
  %vm86 = vcmask 1040384
  %v87 = vsel %vm86, %v85, 0.0
  %88 = vadd.xlane.f32.xlu0 %v87
  %v89 = vpop.xlane.xlu0 %88
  %v90 = vadd.f32 %v49, %v89
  %vm91 = vcmask 0
  %92 = vst.msk [vmem:[#allocation2] sm:$0x1] %vm91, %v90
  // Predicated region
  $region14: #{fn.1} parent=0 // pred_check
    %p93 = pneg %p42
  $region15: #{fn.1} parent=0 // pred_check_branch
    %95 = sbr.rel (%p93) target = $region17
  $region16: #{fn.1} parent=0 // pred_region
    %v96 = vld [vmem:[#allocation2] sm:$0x1]
    %v98 = vlaneseq
    %v99 = vshrl.u32 %v98, 7
    %v100 = vsub.s32 0, %v99
    %v101 = vrot.slane %v96, %v100
    %102 = vset.pattern.permute.xlu0 0
    %103 = vperm.xlu0 %102, %v101
    %v104 = vpop.permute.xlu0 %103
    %106 = vst [vmem:[%s2] sm:$0xff] %v104
  $region17: #{fn.1} parent=0 // pred_fallthru
    _
  // Predicated region
  $region18: #{fn.1} parent=0 // pred_check
    _
  $region19: #{fn.1} parent=0 // pred_check_branch
    %108 = sbr.rel (0) target = $region21
  $region20: #{fn.1} parent=0 // pred_region
    _
  $region21: #{fn.1} parent=0 // pred_fallthru
    _
  // Predicated region
  $region22: #{fn.1} parent=0 // pred_check
    _
  $region23: #{fn.1} parent=0 // pred_check_branch
    %110 = sbr.rel (0) target = $region25
  $region24: #{fn.1} parent=0 // pred_region
    _
  $region25: #{fn.1} parent=0 // pred_fallthru
    _

</llo_original>
